<compile_context>
chip_gen: v7x
topology: tpu7x:2x2x1
jax: 0.10.0
libtpu: 0.0.40
codegen_flags: <defaults>
</compile_context>

<pallas_src>
import jax
import jax.numpy as jnp
from jax.experimental import pallas as pl
from jax.experimental.pallas import tpu as pltpu


def _round_up(x: int, m: int) -> int:
    return (x + m - 1) // m * m


def single_score_kernel(v_ref, wt_ref, wb_ref, wvec_ref, cvec_ref, fcb_ref, out_ref):
    """One row tile: v (TM, vis_dim) -> logits (TM, 1)."""
    # Linear W: (TM, vis_dim) @ (vis_dim, Wp) on the MXU, f32 accumulation.
    h = jnp.dot(v_ref[...], wt_ref[...], preferred_element_type=jnp.float32)
    h = h + wb_ref[...]                                      # + W.bias   (VPU)

    fw = h * wvec_ref[...]                                   # f = h * w (pre-normalize)

    # Fused fc + L2-normalize: two XLU row reductions + a per-row divide.
    norm2 = jnp.sum(fw * fw, axis=1, keepdims=True)          # ||f||^2          (TM, 1)
    s = jnp.sum(h * cvec_ref[...], axis=1, keepdims=True)    # f . fc_row (pre-norm)

    denom = jnp.maximum(jnp.sqrt(norm2), 1e-12)              # exact F.normalize eps
    l = s / denom + fcb_ref[...]                             # (TM, 1)

    out_ref[...] = l.astype(out_ref.dtype)


def single_score(v, w, W_weight, W_bias, fc_weight, fc_bias, *, tile_rows=256):
    """
    v:         (num_bbox, vis_dim)
    w:         (word_size,)
    W_weight:  (word_size, vis_dim)
    W_bias:    (word_size,)
    fc_weight: (1, word_size)
    fc_bias:   (1,)
    returns:   (num_bbox,) float32
    """
    num_bbox, vis_dim = v.shape
    word_size = W_weight.shape[0]

    # ---- parameter preprocessing (tiny; folds per-language vector into fc) ----
    wp = _round_up(word_size, 128)                 # lane-align word_size
    padw = wp - word_size
    wt = jnp.pad(W_weight.T.astype(v.dtype), ((0, 0), (0, padw)))        # (vis_dim, Wp)
    wb = jnp.pad(W_bias.astype(jnp.float32), (0, padw)).reshape(1, wp)   # (1, Wp)
    wvec = jnp.pad(w.astype(jnp.float32), (0, padw)).reshape(1, wp)      # (1, Wp)
    cvec = jnp.pad((w * fc_weight[0]).astype(jnp.float32),
                   (0, padw)).reshape(1, wp)                             # (1, Wp)
    fcb = fc_bias.astype(jnp.float32).reshape(1, 1)                      # (1, 1)

    # ---- row tiling: keep each (double-buffered) v tile <= ~8 MiB ----
    bytes_per_row = vis_dim * jnp.dtype(v.dtype).itemsize
    tm_cap = max(8, (8 * 1024 * 1024 // max(bytes_per_row, 1)) // 8 * 8)
    tm = int(min(tile_rows, tm_cap, _round_up(num_bbox, 8)))
    padded_rows = _round_up(num_bbox, tm)
    if padded_rows != num_bbox:
        v = jnp.pad(v, ((0, padded_rows - num_bbox), (0, 0)))
    grid = (padded_rows // tm,)

    out = pl.pallas_call(
        single_score_kernel,
        out_shape=jax.ShapeDtypeStruct((padded_rows, 1), jnp.float32),
        grid_spec=pltpu.PrefetchScalarGridSpec(
            num_scalar_prefetch=0,
            grid=grid,
            in_specs=[
                pl.BlockSpec((tm, vis_dim), lambda i: (i, 0)),   # v row tile (streamed)
                pl.BlockSpec((vis_dim, wp), lambda i: (0, 0)),   # W^T (resident)
                pl.BlockSpec((1, wp), lambda i: (0, 0)),         # W bias
                pl.BlockSpec((1, wp), lambda i: (0, 0)),         # w (language embed)
                pl.BlockSpec((1, wp), lambda i: (0, 0)),         # w * fc row (fused)
                pl.BlockSpec((1, 1), lambda i: (0, 0)),          # fc bias
            ],
            out_specs=pl.BlockSpec((tm, 1), lambda i: (i, 0)),
        ),
        compiler_params=pltpu.CompilerParams(
            dimension_semantics=("parallel",),      # shard row tiles across TCs (v7x)
            vmem_limit_bytes=48 * 1024 * 1024,      # explicit; fits v7x's 64 MiB VMEM
        ),
    )(v, wt, wb, wvec, cvec, fcb)

    return out[:num_bbox, 0]                        # drop row padding + squeeze(1)


def _torch_like_linear_init(key, out_features, in_features):
    """Deterministic init mimicking nn.Linear default (kaiming-uniform-ish)."""
    kw, kb = jax.random.split(key)
    bound = 1.0 / jnp.sqrt(in_features)
    weight = jax.random.uniform(kw, (out_features, in_features),
                                minval=-bound, maxval=bound, dtype=jnp.float32)
    bias = jax.random.uniform(kb, (out_features,),
                              minval=-bound, maxval=bound, dtype=jnp.float32)
    return weight, bias


if __name__ == "__main__":
    num_bbox, vis_dim, word_size = 8, 32, 16

    key = jax.random.PRNGKey(0)
    k_v, k_w, k_W, k_fc = jax.random.split(key, 4)

    v = jax.random.normal(k_v, (num_bbox, vis_dim), dtype=jnp.float32)
    w = jax.random.normal(k_w, (word_size,), dtype=jnp.float32)

    W_weight, W_bias = _torch_like_linear_init(k_W, word_size, vis_dim)
    fc_weight, fc_bias = _torch_like_linear_init(k_fc, 1, word_size)

    run = jax.jit(single_score)
    logits = run(v, w, W_weight, W_bias, fc_weight, fc_bias)
    jax.block_until_ready(logits)

    # Pure-JAX reference (matches the PyTorch module exactly).
    h = v @ W_weight.T + W_bias
    f = h * w[None, :]
    f = f / jnp.maximum(jnp.linalg.norm(f, axis=1, keepdims=True), 1e-12)
    ref = (f @ fc_weight.T + fc_bias)[:, 0]

    assert logits.shape == (num_bbox,)
    assert jnp.allclose(logits, ref, atol=2e-5, rtol=1e-4), (
        f"max abs err {jnp.max(jnp.abs(logits - ref))}")

    print("KERNEL_OK")
</pallas_src>

<mosaic_0001>
module attributes {stable_mosaic.version = 11 : i64} {
  func.func @single_score_kernel(%arg0: i32, %arg1: memref<8x32xf32, #tpu.memory_space<vmem>>, %arg2: memref<32x128xf32, #tpu.memory_space<vmem>>, %arg3: memref<1x128xf32, #tpu.memory_space<vmem>>, %arg4: memref<1x128xf32, #tpu.memory_space<vmem>>, %arg5: memref<1x128xf32, #tpu.memory_space<vmem>>, %arg6: memref<1x1xf32, #tpu.memory_space<vmem>>, %arg7: memref<8x1xf32, #tpu.memory_space<vmem>>) attributes {dimension_semantics = [#tpu.dimension_semantics<parallel>], iteration_bounds = array<i64: 1>, scalar_prefetch = 0 : i64, scratch_operands = 0 : i64, tpu.core_type = #tpu.core_type<tc>, window_params = [{transform_indices = @transform_0, window_bounds = array<i64: 8, 32>}, {pipeline_mode = #tpu.pipeline_mode<synchronous>, transform_indices = @transform_1, window_bounds = array<i64: 32, 128>}, {pipeline_mode = #tpu.pipeline_mode<synchronous>, transform_indices = @transform_2, window_bounds = array<i64: 1, 128>}, {pipeline_mode = #tpu.pipeline_mode<synchronous>, transform_indices = @transform_3, window_bounds = array<i64: 1, 128>}, {pipeline_mode = #tpu.pipeline_mode<synchronous>, transform_indices = @transform_4, window_bounds = array<i64: 1, 128>}, {pipeline_mode = #tpu.pipeline_mode<synchronous>, transform_indices = @transform_5, window_bounds = array<i64: 1, 1>}, {transform_indices = @transform_6, window_bounds = array<i64: 8, 1>}]} {
    %c0 = arith.constant 0 : index
    %c0_0 = arith.constant 0 : index
    %0 = vector.load %arg1[%c0, %c0_0] : memref<8x32xf32, #tpu.memory_space<vmem>>, vector<8x32xf32>
    %c0_1 = arith.constant 0 : index
    %c0_2 = arith.constant 0 : index
    %1 = vector.load %arg2[%c0_1, %c0_2] : memref<32x128xf32, #tpu.memory_space<vmem>>, vector<32x128xf32>
    %cst = arith.constant dense<0.000000e+00> : vector<8x128xf32>
    %2 = tpu.matmul %0, %1, %cst {dimension_numbers = #tpu.dot_dimension_numbers<[1], [0], [0], [1], [0, 0, 1, 1], [], []>} : vector<8x32xf32>, vector<32x128xf32>, vector<8x128xf32> -> vector<8x128xf32>
    %c0_3 = arith.constant 0 : index
    %c0_4 = arith.constant 0 : index
    %3 = vector.load %arg3[%c0_3, %c0_4] : memref<1x128xf32, #tpu.memory_space<vmem>>, vector<1x128xf32>
    %4 = vector.broadcast %3 : vector<1x128xf32> to vector<8x128xf32>
    %5 = arith.addf %2, %4 : vector<8x128xf32>
    %c0_5 = arith.constant 0 : index
    %c0_6 = arith.constant 0 : index
    %6 = vector.load %arg4[%c0_5, %c0_6] : memref<1x128xf32, #tpu.memory_space<vmem>>, vector<1x128xf32>
    %7 = vector.broadcast %6 : vector<1x128xf32> to vector<8x128xf32>
    %8 = arith.mulf %5, %7 : vector<8x128xf32>
    %9 = arith.mulf %8, %8 : vector<8x128xf32>
    %cst_7 = arith.constant dense<0.000000e+00> : vector<8xf32>
    %10 = vector.multi_reduction <add>, %9, %cst_7 [1] : vector<8x128xf32> to vector<8xf32>
    %11 = vector.shape_cast %10 : vector<8xf32> to vector<8x1xf32>
    %c0_8 = arith.constant 0 : index
    %c0_9 = arith.constant 0 : index
    %12 = vector.load %arg5[%c0_8, %c0_9] : memref<1x128xf32, #tpu.memory_space<vmem>>, vector<1x128xf32>
    %13 = vector.broadcast %12 : vector<1x128xf32> to vector<8x128xf32>
    %14 = arith.mulf %5, %13 : vector<8x128xf32>
    %cst_10 = arith.constant dense<0.000000e+00> : vector<8xf32>
    %15 = vector.multi_reduction <add>, %14, %cst_10 [1] : vector<8x128xf32> to vector<8xf32>
    %16 = vector.shape_cast %15 : vector<8xf32> to vector<8x1xf32>
    %17 = math.sqrt %11 : vector<8x1xf32>
    %cst_11 = arith.constant 9.99999996E-13 : f32
    %18 = vector.broadcast %cst_11 : f32 to vector<8x1xf32>
    %19 = arith.maximumf %17, %18 : vector<8x1xf32>
    %20 = arith.divf %16, %19 : vector<8x1xf32>
    %c0_12 = arith.constant 0 : index
    %c0_13 = arith.constant 0 : index
    %21 = vector.load %arg6[%c0_12, %c0_13] : memref<1x1xf32, #tpu.memory_space<vmem>>, vector<1x1xf32>
    %22 = vector.broadcast %21 : vector<1x1xf32> to vector<8x1xf32>
    %23 = arith.addf %20, %22 : vector<8x1xf32>
    %c0_14 = arith.constant 0 : index
    %c0_15 = arith.constant 0 : index
    %24 = vector.load %arg7[%c0_14, %c0_15] : memref<8x1xf32, #tpu.memory_space<vmem>>, vector<8x1xf32>
    tpu.vector_store %arg7[%c0_14, %c0_15], %23 {strides = array<i32>} : memref<8x1xf32, #tpu.memory_space<vmem>>, vector<8x1xf32>,
    return
  }
  func.func @transform_0(%arg0: i32) -> (i32, i32) {
    %c0_i32 = arith.constant 0 : i32
    %c0_i32_0 = arith.constant 0 : i32
    return %arg0, %c0_i32 : i32, i32
  }
  func.func @transform_1(%arg0: i32) -> (i32, i32) {
    %c0_i32 = arith.constant 0 : i32
    %c0_i32_0 = arith.constant 0 : i32
    %c0_i32_1 = arith.constant 0 : i32
    return %c0_i32, %c0_i32_0 : i32, i32
  }
  func.func @transform_2(%arg0: i32) -> (i32, i32) {
    %c0_i32 = arith.constant 0 : i32
    %c0_i32_0 = arith.constant 0 : i32
    %c0_i32_1 = arith.constant 0 : i32
    return %c0_i32, %c0_i32_0 : i32, i32
  }
  func.func @transform_3(%arg0: i32) -> (i32, i32) {
    %c0_i32 = arith.constant 0 : i32
    %c0_i32_0 = arith.constant 0 : i32
    %c0_i32_1 = arith.constant 0 : i32
    return %c0_i32, %c0_i32_0 : i32, i32
  }
  func.func @transform_4(%arg0: i32) -> (i32, i32) {
    %c0_i32 = arith.constant 0 : i32
    %c0_i32_0 = arith.constant 0 : i32
    %c0_i32_1 = arith.constant 0 : i32
    return %c0_i32, %c0_i32_0 : i32, i32
  }
  func.func @transform_5(%arg0: i32) -> (i32, i32) {
    %c0_i32 = arith.constant 0 : i32
    %c0_i32_0 = arith.constant 0 : i32
    %c0_i32_1 = arith.constant 0 : i32
    return %c0_i32, %c0_i32_0 : i32, i32
  }
  func.func @transform_6(%arg0: i32) -> (i32, i32) {
    %c0_i32 = arith.constant 0 : i32
    %c0_i32_0 = arith.constant 0 : i32
    return %arg0, %c0_i32 : i32, i32
  }
}

</mosaic_0001>

<llo_original>
// kernel: single_score.1
$region0: #{single_score.1}
  #allocation0 [shape = 'u32[]', space=smem, size = 0x4, offset = 0x4, fixed_abs, tag = 'smem constant byte address 0x4 - core index']
  #allocation1 [shape = 'u32[144,128]{1,0:T(1,128)}', space=vmem, size = 0x12000, scoped, tag = 'internal scratch']
  #allocation2 [shape = 'f32[1,1]{1,0:T(1,128)S(1)}', space=vmem, size = 0x200, scoped, tag = 'scoped memory for single_score.1']
  %s0 = inlined_call_operand.vmem [shape: f32[8,32], index: 0, kind: input, shape index: {}]
  %s1 = inlined_call_operand.vmem [shape: f32[32,128], index: 1, kind: input, shape index: {}]
  %s2 = inlined_call_operand.vmem [shape: f32[1,128], index: 2, kind: input, shape index: {}]
  %s3 = inlined_call_operand.vmem [shape: f32[1,128], index: 3, kind: input, shape index: {}]
  %s4 = inlined_call_operand.vmem [shape: f32[1,128], index: 4, kind: input, shape index: {}]
  %s5 = inlined_call_operand.<no memory space> [shape: f32[1,1], index: 5, kind: input, shape index: {}]
  %s6 = inlined_call_operand.vmem [shape: f32[8,1], index: 6, kind: output, shape index: {}]
  %s7 = sld [smem:[#allocation0]]
  $region34: #{single_score.1} parent=0
    _
  %s9 = ssub.s32 1, %s7
  %s10 = scalar_select 0, %s9, %s7
  %v11 = vstv %s5
  %12 = vst [vmem:[#allocation2] sm:$0x1] %v11
  // Predicated region
  $region2: #{single_score.1} parent=0 // pred_check
    _
  $region3: #{single_score.1} parent=0 // pred_check_branch
    %14 = sbr.rel (0) target = $region5
  $region4: #{single_score.1} parent=0 // pred_region
    _
  $region5: #{single_score.1} parent=0 // pred_fallthru
    _
  // Predicated region
  $region6: #{single_score.1} parent=0 // pred_check
    _
  $region7: #{single_score.1} parent=0 // pred_check_branch
    %16 = sbr.rel (0) target = $region9
  $region8: #{single_score.1} parent=0 // pred_region
    _
  $region9: #{single_score.1} parent=0 // pred_fallthru
    _
  // Predicated region
  $region10: #{single_score.1} parent=0 // pred_check
    _
  $region11: #{single_score.1} parent=0 // pred_check_branch
    %18 = sbr.rel (0) target = $region13
  $region12: #{single_score.1} parent=0 // pred_region
    _
  $region13: #{single_score.1} parent=0 // pred_fallthru
    _
  // Predicated region
  $region14: #{single_score.1} parent=0 // pred_check
    _
  $region15: #{single_score.1} parent=0 // pred_check_branch
    %20 = sbr.rel (0) target = $region17
  $region16: #{single_score.1} parent=0 // pred_region
    _
  $region17: #{single_score.1} parent=0 // pred_fallthru
    _
  // Predicated region
  $region18: #{single_score.1} parent=0 // pred_check
    _
  $region19: #{single_score.1} parent=0 // pred_check_branch
    %22 = sbr.rel (0) target = $region21
  $region20: #{single_score.1} parent=0 // pred_region
    _
  $region21: #{single_score.1} parent=0 // pred_fallthru
    _
  // Predicated region
  $region22: #{single_score.1} parent=0 // pred_check
    _
  $region23: #{single_score.1} parent=0 // pred_check_branch
    %24 = sbr.rel (0) target = $region25
  $region24: #{single_score.1} parent=0 // pred_region
    _
  $region25: #{single_score.1} parent=0 // pred_fallthru
    _
  %v25 = vld [vmem:[%s0] sm:$0xff]
  %v26 = vld [vmem:[%s1] sm:$0xff]
  %v27 = vld [vmem:[%s1 + $0x8] sm:$0xff]
  %v28 = vld [vmem:[%s1 + $0x10] sm:$0xff]
  %v29 = vld [vmem:[%s1 + $0x18] sm:$0xff]
  %v30 = vld [vmem:[%s2] sm:$0x1]
  %v32 = vlaneseq
  %v33 = vshrl.u32 %v32, 7
  %v34 = vsub.s32 0, %v33
  %v35 = vrot.slane %v30, %v34
  %vm37 = vcmask 261120
  %v39 = vsel %vm37, %v25, 0
  %41 = vmatprep.subr.mxu0 0.0
  %42 = vmatpush1.msra.mxu0 %v26
  %43 = vmatprep.subr.mxu0 0.0
  %44 = vmatpush1.msra.mxu0 %v27
  %45 = vmatprep.subr.mxu0 0.0
  %46 = vmatpush1.msra.mxu0 %v28
  %47 = vmatprep.subr.mxu0 0.0
  %48 = vmatpush1.msra.mxu0 %v29
  %49 = vmatprep.subr.mxu0 0.0
  %50 = vmatpush1.msra.mxu0 0.0
  %51 = vmatprep.subr.mxu0 0.0
  %52 = vmatpush1.msra.mxu0 0.0
  %53 = vmatprep.subr.mxu0 0.0
  %54 = vmatpush1.msra.mxu0 0.0
  %55 = vmatprep.subr.mxu0 0.0
  %56 = vmatpush1.msra.mxu0 0.0
  %57 = vmatprep.subr.mxu0 0.0
  %58 = vmatpush1.msra.mxu0 0.0
  %59 = vmatprep.subr.mxu0 0.0
  %60 = vmatpush1.msra.mxu0 0.0
  %61 = vmatprep.subr.mxu0 0.0
  %62 = vmatpush1.msra.mxu0 0.0
  %63 = vmatprep.subr.mxu0 0.0
  %64 = vmatpush1.msra.mxu0 0.0
  %65 = vmatprep.subr.mxu0 0.0
  %66 = vmatpush1.msra.mxu0 0.0
  %67 = vmatprep.subr.mxu0 0.0
  %68 = vmatpush1.msra.mxu0 0.0
  %69 = vmatprep.subr.mxu0 0.0
  %70 = vmatpush1.msra.mxu0 0.0
  %71 = vmatprep.subr.mxu0 0.0
  %72 = vmatpush1.msra.mxu0 0.0
  %73 = vmatprep.subr.mxu0 0.0
  %74 = vmatpush1.msra.mxu0 0.0
  %75 = vmatprep.subr.mxu0 0.0
  %76 = vmatpush1.msra.mxu0 0.0
  %77 = vmatprep.subr.mxu0 0.0
  %78 = vmatpush1.msra.mxu0 0.0
  %79 = vmatprep.subr.mxu0 0.0
  %80 = vmatpush1.msra.mxu0 0.0
  %81 = vmatprep.subr.mxu0 0.0
  %82 = vmatpush1.msra.mxu0 0.0
  %83 = vmatprep.subr.mxu0 0.0
  %84 = vmatpush1.msra.mxu0 0.0
  %85 = vmatprep.subr.mxu0 0.0
  %86 = vmatpush1.msra.mxu0 0.0
  %87 = vmatprep.subr.mxu0 0.0
  %88 = vmatpush1.msra.mxu0 0.0
  %89 = vmatprep.subr.mxu0 0.0
  %90 = vmatpush1.msra.mxu0 0.0
  %91 = vmatprep.subr.mxu0 0.0
  %92 = vmatpush1.msra.mxu0 0.0
  %93 = vmatprep.subr.mxu0 0.0
  %94 = vmatpush1.msra.mxu0 0.0
  %95 = vmatprep.subr.mxu0 0.0
  %96 = vmatpush1.msra.mxu0 0.0
  %97 = vmatprep.subr.mxu0 0.0
  %98 = vmatpush1.msra.mxu0 0.0
  %99 = vmatprep.subr.mxu0 0.0
  %100 = vmatpush1.msra.mxu0 0.0
  %101 = vmatprep.subr.mxu0 0.0
  %102 = vmatpush1.msra.mxu0 0.0
  %103 = vmatprep.subr.mxu0 0.0
  %104 = vmatpush1.msra.mxu0 0.0
  %105 = vmatprep.mubr.f32.mxu0 0.0
  %106 = vmatmul.mubr.f32.gmra.mrb[0].mxu0 %v39
  %v107 = vpop.f32.mrb[0].mxu0
  %v108 = vadd.f32 %v35, %v107
  %v109 = vpop.f32.mrb[0].mxu0
  %110 = vdwg.mxu0
  %v111 = vld [vmem:[%s3] sm:$0x1]
  %v113 = vlaneseq
  %v114 = vshrl.u32 %v113, 7
  %v115 = vsub.s32 0, %v114
  %v116 = vrot.slane %v111, %v115
  %v118 = vmul.f32 %v108, %v116
  %v119 = vmul.f32 %v118, %v118
  %120 = vadd.xlane.f32.xlu0 %v119
  %v121 = vpop.xlane.xlu0 %120
  %v122 = vld [vmem:[%s4] sm:$0x1]
  %v124 = vlaneseq
  %v125 = vshrl.u32 %v124, 7
  %v126 = vsub.s32 0, %v125
  %v127 = vrot.slane %v122, %v126
  %v129 = vmul.f32 %v108, %v127
  %130 = vadd.xlane.f32.xlu0 %v129
  %v131 = vpop.xlane.xlu0 %130
  %v132 = vrsqrt.pop %v121
  %v133 = vmul.f32 %v121, %v132
  %vm134 = vcmp.eq.f32.partialorder %v121, inf
  %v135 = vsel %vm134, %v121, %v133
  %vm136 = vcmp.eq.f32.partialorder %v121, 0.0
  %v137 = vand.u32 %v121, 2147483648
  %v138 = vsel %vm136, %v137, %v135
  %v139 = vmax.f32 %v138, 1e-12
  %v140 = vrcp.pop %v139
  %v141 = vmul.f32 %v131, %v140
  %v142 = vld [vmem:[#allocation2] sm:$0x1]
  %v144 = vlaneseq
  %v145 = vshrl.u32 %v144, 7
  %v146 = vsub.s32 0, %v145
  %v147 = vrot.slane %v142, %v146
  %v149 = vadd.f32 %v141, %v147
  %vm150 = vcmask 7168
  %151 = vst.msk [vmem:[%s6] sm:$0xff] %vm150, %v149
  // Predicated region
  $region26: #{single_score.1} parent=0 // pred_check
    _
  $region27: #{single_score.1} parent=0 // pred_check_branch
    %153 = sbr.rel (0) target = $region29
  $region28: #{single_score.1} parent=0 // pred_region
    _
  $region29: #{single_score.1} parent=0 // pred_fallthru
    _
  // Predicated region
  $region30: #{single_score.1} parent=0 // pred_check
    _
  $region31: #{single_score.1} parent=0 // pred_check_branch
    %155 = sbr.rel (0) target = $region33
  $region32: #{single_score.1} parent=0 // pred_region
    _
  $region33: #{single_score.1} parent=0 // pred_fallthru
    _

</llo_original>
